<compile_context>
chip_gen: v6e
topology: v6e:2x2x1
jax: 0.10.0
libtpu: 0.0.40
codegen_flags: <defaults>
</compile_context>

<pallas_src>
import math
from functools import partial

import jax
import jax.numpy as jnp
from jax.experimental import pallas as pl
from jax.experimental.pallas import tpu as pltpu


def _vmem_limit_bytes():
    # Generation-aware scoped-VMEM budget: ~3/4 of physical, capped at 96 MiB.
    #   v5e/v6e (128 MiB physical) -> 96 MiB;  v7x (64 MiB physical) -> 48 MiB.
    try:
        cap = pltpu.get_tpu_info().vmem_capacity_bytes
    except Exception:
        cap = 64 * 1024 * 1024
    return int(min(cap * 3 // 4, 96 * 1024 * 1024))


_VMEM_LIMIT = _vmem_limit_bytes()

_M_TILES = (1024, 512, 256, 128)   # row tiles (activations)
_NK_TILES = (512, 256, 128)        # column / reduction tiles


def _pick_tile(dim, candidates=_NK_TILES):
    """Largest candidate tile that divides `dim`, else the full dim (toy sizes)."""
    for c in candidates:
        if dim % c == 0:
            return c
    return dim


# ----------------------------- Pallas kernel bodies -----------------------------

def _linear_kernel(x_ref, w_ref, b_ref, o_ref, acc_ref, *, activation):
    """Tiled matmul; fp32 VMEM K-accumulator; bias (+ optional GELU) epilogue."""
    k = pl.program_id(2)

    @pl.when(k == 0)
    def _():
        acc_ref[...] = jnp.zeros_like(acc_ref)

    acc_ref[...] += jnp.dot(x_ref[...], w_ref[...],
                            preferred_element_type=jnp.float32)

    @pl.when(k == pl.num_programs(2) - 1)
    def _():
        h = acc_ref[...] + b_ref[...]
        if activation == "gelu":
            # TODO(synk): HF BERT uses exact erf-GELU; tanh approximation here.
            c = 0.7978845608028654  # sqrt(2/pi)
            h = 0.5 * h * (1.0 + jnp.tanh(c * (h + 0.044715 * h * h * h)))
        o_ref[...] = h.astype(o_ref.dtype)


def _qkv_head_proj_kernel(x_ref, w_ref, b_ref, o_ref, acc_ref):
    """Fused QKV projection, written directly in head-major (3*NH, M, DH) layout."""
    k = pl.program_id(2)

    @pl.when(k == 0)
    def _():
        acc_ref[...] = jnp.zeros_like(acc_ref)

    acc_ref[...] += jnp.dot(x_ref[...], w_ref[0],
                            preferred_element_type=jnp.float32)

    @pl.when(k == pl.num_programs(2) - 1)
    def _():
        o_ref[0] = (acc_ref[...] + b_ref[0]).astype(o_ref.dtype)


def _flash_attn_kernel(q_ref, k_ref, v_ref, mb_ref, o_ref, m_ref, l_ref, acc_ref):
    """Per-(batch, head, q-tile) online-softmax attention over KV tiles."""
    ki = pl.program_id(3)

    @pl.when(ki == 0)
    def _():
        m_ref[...] = jnp.full_like(m_ref, -jnp.inf)
        l_ref[...] = jnp.zeros_like(l_ref)
        acc_ref[...] = jnp.zeros_like(acc_ref)

    q = q_ref[0]                          # (tq, DH) bf16; 1/sqrt(DH) folded into Wq
    k = k_ref[0]                          # (tkv, DH) bf16
    s = jax.lax.dot_general(q, k, (((1,), (1,)), ((), ())),
                            preferred_element_type=jnp.float32)     # (tq, tkv)
    s = s + mb_ref[0]                     # additive attention-mask bias (1, tkv)

    m_prev = m_ref[...]
    m_new = jnp.maximum(m_prev, jnp.max(s, axis=-1, keepdims=True))
    alpha = jnp.exp(m_prev - m_new)
    p = jnp.exp(s - m_new)
    l_ref[...] = alpha * l_ref[...] + jnp.sum(p, axis=-1, keepdims=True)
    acc_ref[...] = alpha * acc_ref[...] + jnp.dot(
        p.astype(v_ref.dtype), v_ref[0], preferred_element_type=jnp.float32)
    m_ref[...] = m_new

    @pl.when(ki == pl.num_programs(3) - 1)
    def _():
        # TODO(synk): approx reciprocal (EUP); swap for exact divide if bit parity needed.
        o_ref[0] = (acc_ref[...] * pl.reciprocal(l_ref[...], approx=True)
                    ).astype(o_ref.dtype)


def _headmajor_matmul_ln_kernel(x_ref, w_ref, b_ref, r_ref, g_ref, be_ref,
                                o_ref, acc_ref):
    """sum_h ctx[h] @ Wo[h]; fused bias + residual-add + LayerNorm epilogue."""
    h = pl.program_id(1)

    @pl.when(h == 0)
    def _():
        acc_ref[...] = jnp.zeros_like(acc_ref)

    acc_ref[...] += jnp.dot(x_ref[0], w_ref[0],
                            preferred_element_type=jnp.float32)

    @pl.when(h == pl.num_programs(1) - 1)
    def _():
        y = acc_ref[...] + b_ref[...] + r_ref[...].astype(jnp.float32)
        mean = jnp.mean(y, axis=-1, keepdims=True)
        var = jnp.mean(jnp.square(y - mean), axis=-1, keepdims=True)
        inv = jax.lax.rsqrt(var + 1e-12)
        o_ref[...] = ((y - mean) * inv * g_ref[...] + be_ref[...]).astype(o_ref.dtype)


def _matmul_ln_kernel(x_ref, w_ref, b_ref, r_ref, g_ref, be_ref, o_ref, acc_ref):
    """Tiled matmul (N = H untiled); fused bias + residual-add + LayerNorm epilogue."""
    k = pl.program_id(1)

    @pl.when(k == 0)
    def _():
        acc_ref[...] = jnp.zeros_like(acc_ref)

    acc_ref[...] += jnp.dot(x_ref[...], w_ref[...],
                            preferred_element_type=jnp.float32)

    @pl.when(k == pl.num_programs(1) - 1)
    def _():
        y = acc_ref[...] + b_ref[...] + r_ref[...].astype(jnp.float32)
        mean = jnp.mean(y, axis=-1, keepdims=True)
        var = jnp.mean(jnp.square(y - mean), axis=-1, keepdims=True)
        inv = jax.lax.rsqrt(var + 1e-12)
        o_ref[...] = ((y - mean) * inv * g_ref[...] + be_ref[...]).astype(o_ref.dtype)


def _layernorm_kernel(x_ref, g_ref, b_ref, o_ref):
    h = x_ref[...].astype(jnp.float32)
    mean = jnp.mean(h, axis=-1, keepdims=True)
    var = jnp.mean(jnp.square(h - mean), axis=-1, keepdims=True)
    inv = jax.lax.rsqrt(var + 1e-12)
    o_ref[...] = ((h - mean) * inv * g_ref[...] + b_ref[...]).astype(o_ref.dtype)


# ----------------------------- kernel wrappers -----------------------------

def linear(x, w, b, activation=None):
    """x:(M,K) bf16 @ w:(K,N) bf16 + b:(1,N) f32  ->  (M,N) bf16 (+ optional GELU)."""
    M, K = x.shape
    N = w.shape[1]
    tm = _pick_tile(M, _M_TILES)
    tn = _pick_tile(N)
    tk = _pick_tile(K)
    return pl.pallas_call(
        partial(_linear_kernel, activation=activation),
        out_shape=jax.ShapeDtypeStruct((M, N), jnp.bfloat16),
        grid=(M // tm, N // tn, K // tk),
        in_specs=[pl.BlockSpec((tm, tk), lambda i, j, k: (i, k)),
                  pl.BlockSpec((tk, tn), lambda i, j, k: (k, j)),
                  pl.BlockSpec((1, tn), lambda i, j, k: (0, j))],
        out_specs=pl.BlockSpec((tm, tn), lambda i, j, k: (i, j)),
        scratch_shapes=[pltpu.VMEM((tm, tn), jnp.float32)],
        compiler_params=pltpu.CompilerParams(
            dimension_semantics=("parallel", "parallel", "arbitrary"),
            vmem_limit_bytes=_VMEM_LIMIT),
    )(x, w, b)


def qkv_head_proj(x, w_heads, b_heads):
    """x:(M,H) bf16; w_heads:(3NH,H,DH) bf16; b_heads:(3NH,1,DH) f32 -> (3NH,M,DH) bf16."""
    M, K = x.shape
    n_comp, _, DH = w_heads.shape
    tm = _pick_tile(M, _M_TILES)
    tk = _pick_tile(K)
    return pl.pallas_call(
        _qkv_head_proj_kernel,
        out_shape=jax.ShapeDtypeStruct((n_comp, M, DH), jnp.bfloat16),
        grid=(M // tm, n_comp, K // tk),
        in_specs=[pl.BlockSpec((tm, tk), lambda i, j, k: (i, k)),
                  pl.BlockSpec((1, tk, DH), lambda i, j, k: (j, k, 0)),
                  pl.BlockSpec((1, 1, DH), lambda i, j, k: (j, 0, 0))],
        out_specs=pl.BlockSpec((1, tm, DH), lambda i, j, k: (j, i, 0)),
        scratch_shapes=[pltpu.VMEM((tm, DH), jnp.float32)],
        compiler_params=pltpu.CompilerParams(
            dimension_semantics=("parallel", "parallel", "arbitrary"),
            vmem_limit_bytes=_VMEM_LIMIT),
    )(x, w_heads, b_heads)


def flash_attention(qkv_heads, mask_bias, num_heads, batch, seq):
    """qkv_heads:(3NH, B*S, DH) bf16; mask_bias:(B,1,S) f32 -> ctx:(NH, B*S, DH) bf16."""
    _, M, DH = qkv_heads.shape
    NH, B, S = num_heads, batch, seq
    tq = _pick_tile(S)
    tkv = _pick_tile(S)
    nq, nkv = S // tq, S // tkv

    q_map = lambda b, h, qi, ki: (h, b * nq + qi, 0)
    k_map = lambda b, h, qi, ki: (NH + h, b * nkv + ki, 0)
    v_map = lambda b, h, qi, ki: (2 * NH + h, b * nkv + ki, 0)
    m_map = lambda b, h, qi, ki: (b, 0, ki)
    o_map = lambda b, h, qi, ki: (h, b * nq + qi, 0)

    return pl.pallas_call(
        _flash_attn_kernel,
        out_shape=jax.ShapeDtypeStruct((NH, M, DH), jnp.bfloat16),
        grid=(B, NH, nq, nkv),
        in_specs=[pl.BlockSpec((1, tq, DH), q_map),
                  pl.BlockSpec((1, tkv, DH), k_map),
                  pl.BlockSpec((1, tkv, DH), v_map),
                  pl.BlockSpec((1, 1, tkv), m_map)],
        out_specs=pl.BlockSpec((1, tq, DH), o_map),
        scratch_shapes=[pltpu.VMEM((tq, 1), jnp.float32),
                        pltpu.VMEM((tq, 1), jnp.float32),
                        pltpu.VMEM((tq, DH), jnp.float32)],
        compiler_params=pltpu.CompilerParams(
            dimension_semantics=("parallel", "parallel", "parallel", "arbitrary"),
            vmem_limit_bytes=_VMEM_LIMIT),
    )(qkv_heads, qkv_heads, qkv_heads, mask_bias)


def attn_out_proj_ln(ctx_heads, wo_heads, bo, residual, gamma, beta):
    """ctx:(NH,M,DH) bf16; wo:(NH,DH,H) bf16 -> LayerNorm(ctx@Wo + bo + residual) bf16."""
    NH, M, DH = ctx_heads.shape
    H = wo_heads.shape[2]
    tm = _pick_tile(M, _M_TILES)
    return pl.pallas_call(
        _headmajor_matmul_ln_kernel,
        out_shape=jax.ShapeDtypeStruct((M, H), jnp.bfloat16),
        grid=(M // tm, NH),
        in_specs=[pl.BlockSpec((1, tm, DH), lambda i, h: (h, i, 0)),
                  pl.BlockSpec((1, DH, H), lambda i, h: (h, 0, 0)),
                  pl.BlockSpec((1, H), lambda i, h: (0, 0)),
                  pl.BlockSpec((tm, H), lambda i, h: (i, 0)),
                  pl.BlockSpec((1, H), lambda i, h: (0, 0)),
                  pl.BlockSpec((1, H), lambda i, h: (0, 0))],
        out_specs=pl.BlockSpec((tm, H), lambda i, h: (i, 0)),
        scratch_shapes=[pltpu.VMEM((tm, H), jnp.float32)],
        compiler_params=pltpu.CompilerParams(
            dimension_semantics=("parallel", "arbitrary"),
            vmem_limit_bytes=_VMEM_LIMIT),
    )(ctx_heads, wo_heads, bo, residual, gamma, beta)


def linear_add_layernorm(x, w, b, residual, gamma, beta):
    """Tiled matmul + fused bias + residual add + LayerNorm; bf16 residual stream."""
    M, K = x.shape
    N = w.shape[1]
    tm = _pick_tile(M, _M_TILES)
    tk = _pick_tile(K)
    return pl.pallas_call(
        _matmul_ln_kernel,
        out_shape=jax.ShapeDtypeStruct((M, N), jnp.bfloat16),
        grid=(M // tm, K // tk),
        in_specs=[pl.BlockSpec((tm, tk), lambda i, k: (i, k)),
                  pl.BlockSpec((tk, N), lambda i, k: (k, 0)),
                  pl.BlockSpec((1, N), lambda i, k: (0, 0)),
                  pl.BlockSpec((tm, N), lambda i, k: (i, 0)),
                  pl.BlockSpec((1, N), lambda i, k: (0, 0)),
                  pl.BlockSpec((1, N), lambda i, k: (0, 0))],
        out_specs=pl.BlockSpec((tm, N), lambda i, k: (i, 0)),
        scratch_shapes=[pltpu.VMEM((tm, N), jnp.float32)],
        compiler_params=pltpu.CompilerParams(
            dimension_semantics=("parallel", "arbitrary"),
            vmem_limit_bytes=_VMEM_LIMIT),
    )(x, w, b, residual, gamma, beta)


def layernorm(x, gamma, beta):
    M, H = x.shape
    tm = _pick_tile(M, _M_TILES)
    return pl.pallas_call(
        _layernorm_kernel,
        out_shape=jax.ShapeDtypeStruct((M, H), jnp.bfloat16),
        grid=(M // tm,),
        in_specs=[pl.BlockSpec((tm, H), lambda i: (i, 0)),
                  pl.BlockSpec((1, H), lambda i: (0, 0)),
                  pl.BlockSpec((1, H), lambda i: (0, 0))],
        out_specs=pl.BlockSpec((tm, H), lambda i: (i, 0)),
        compiler_params=pltpu.CompilerParams(
            dimension_semantics=("parallel",),
            vmem_limit_bytes=_VMEM_LIMIT),
    )(x, gamma, beta)


# ----------------------------- parameters -----------------------------

def init_params(key, cfg):
    """Weights are stored in the exact dtype/layout the kernels consume (bf16 once)."""
    H, I, NH = cfg['hidden'], cfg['intermediate'], cfg['num_heads']
    DH = H // NH

    def normal(k, shape, std=0.02):
        return std * jax.random.normal(k, shape, dtype=jnp.float32)

    keys = iter(jax.random.split(key, 8 + cfg['num_layers'] * 8))
    params = {
        'word_emb': normal(next(keys), (cfg['vocab'], H)),
        'pos_emb': normal(next(keys), (cfg['max_pos'], H)),
        'type_emb': normal(next(keys), (cfg['type_vocab'], H)),
        'emb_ln_g': jnp.ones((1, H), jnp.float32),
        'emb_ln_b': jnp.zeros((1, H), jnp.float32),
        'cls_w': normal(next(keys), (H, cfg['num_labels'])),
        'cls_b': jnp.zeros((cfg['num_labels'],), jnp.float32),
        'layers': [],
    }
    scale = 1.0 / math.sqrt(DH)
    for _ in range(cfg['num_layers']):
        # Fused Q|K|V projection (H, 3H), re-laid-out head-major as (3*NH, H, DH)
        # so the QKV kernel writes lane-contiguous per-head outputs; the
        # 1/sqrt(DH) attention scale is folded into the Q weights and bias.
        w_qkv = normal(next(keys), (H, 3 * H))
        b_qkv = jnp.zeros((3 * H,), jnp.float32)
        w_heads = (w_qkv.reshape(H, 3, NH, DH)
                        .transpose(1, 2, 0, 3)
                        .reshape(3 * NH, H, DH))
        b_heads = b_qkv.reshape(3 * NH, 1, DH)
        w_heads = w_heads.at[:NH].multiply(scale)
        b_heads = b_heads.at[:NH].multiply(scale)

        wo = normal(next(keys), (H, H))
        wo_heads = wo.reshape(NH, DH, H)   # rows of Wo grouped per head

        # TODO(synk): optionally store FFN/QKV weights as fp8 on v7x (MXU-native).
        params['layers'].append({
            'w_qkv_heads': w_heads.astype(jnp.bfloat16),
            'b_qkv_heads': b_heads,
            'wo_heads': wo_heads.astype(jnp.bfloat16),
            'bo': jnp.zeros((1, H), jnp.float32),
            'ln1_g': jnp.ones((1, H), jnp.float32),
            'ln1_b': jnp.zeros((1, H), jnp.float32),
            'w1': normal(next(keys), (H, I)).astype(jnp.bfloat16),
            'b1': jnp.zeros((1, I), jnp.float32),
            'w2': normal(next(keys), (I, H)).astype(jnp.bfloat16),
            'b2': jnp.zeros((1, H), jnp.float32),
            'ln2_g': jnp.ones((1, H), jnp.float32),
            'ln2_b': jnp.zeros((1, H), jnp.float32),
        })
    return params


# ----------------------------- forward pass -----------------------------

def joint_bert_forward(params, input_ids, attention_mask, cfg):
    B, S = input_ids.shape
    H = cfg['hidden']
    NH = cfg['num_heads']

    # --- embeddings (table gathers stay in XLA; LayerNorm is a Pallas kernel) ---
    we = params['word_emb'][input_ids]                   # (B, S, H)
    pe = params['pos_emb'][:S][None, :, :]               # (1, S, H)
    te = params['type_emb'][0][None, None, :]            # token_type_ids == 0
    emb = (we + pe + te).reshape(B * S, H)
    x = layernorm(emb, params['emb_ln_g'], params['emb_ln_b'])   # bf16 residual stream

    # additive attention mask bias, computed once
    mask_bias = ((1.0 - attention_mask.astype(jnp.float32)) * -10000.0
                 ).reshape(B, 1, S)

    # --- transformer encoder layers ---
    for p in params['layers']:
        qkv = qkv_head_proj(x, p['w_qkv_heads'], p['b_qkv_heads'])    # (3NH, B*S, DH)
        ctx = flash_attention(qkv, mask_bias, NH, B, S)               # (NH, B*S, DH)
        x = attn_out_proj_ln(ctx, p['wo_heads'], p['bo'],
                             x, p['ln1_g'], p['ln1_b'])               # (B*S, H) bf16
        hmid = linear(x, p['w1'], p['b1'], activation='gelu')         # (B*S, I) bf16
        x = linear_add_layernorm(hmid, p['w2'], p['b2'],
                                 x, p['ln2_g'], p['ln2_b'])           # (B*S, H) bf16

    last_hidden_state = x.reshape(B, S, H)
    cls_emb = last_hidden_state[:, 0, :].astype(jnp.float32)          # [:, 0, :]
    # Classifier head: num_labels (=2) << 128 lanes -> a Pallas launch would be
    # pure masked-store overhead; keep it in plain XLA.
    logits = jnp.dot(cls_emb, params['cls_w']) + params['cls_b']
    return cls_emb, logits


# ----------------------------- main -----------------------------

if __name__ == "__main__":
    cfg = dict(vocab=100, hidden=32, num_layers=2, num_heads=4,
               intermediate=64, max_pos=16, type_vocab=2, num_labels=2)

    key = jax.random.PRNGKey(0)
    pkey, ikey = jax.random.split(key)
    params = init_params(pkey, cfg)

    B, S = 2, 8
    input_ids = jax.random.randint(ikey, (B, S), 0, cfg['vocab'], dtype=jnp.int32)
    attention_mask = jnp.array([[1, 1, 1, 1, 1, 1, 1, 1],
                                [1, 1, 1, 1, 1, 1, 0, 0]], dtype=jnp.int32)

    cls_emb, logits = joint_bert_forward(params, input_ids, attention_mask, cfg)
    jax.block_until_ready((cls_emb, logits))

    assert cls_emb.shape == (B, cfg['hidden'])
    assert logits.shape == (B, cfg['num_labels'])
    assert bool(jnp.all(jnp.isfinite(cls_emb))) and bool(jnp.all(jnp.isfinite(logits)))
    print("KERNEL_OK")
</pallas_src>

<mosaic_0001>
module attributes {stable_mosaic.version = 11 : i64} {
  func.func @_layernorm_kernel(%arg0: i32, %arg1: memref<16x32xf32, #tpu.memory_space<vmem>>, %arg2: memref<1x32xf32, #tpu.memory_space<vmem>>, %arg3: memref<1x32xf32, #tpu.memory_space<vmem>>, %arg4: memref<16x32xbf16, #tpu.memory_space<vmem>>) attributes {dimension_semantics = [#tpu.dimension_semantics<parallel>], iteration_bounds = array<i64: 1>, scalar_prefetch = 0 : i64, scratch_operands = 0 : i64, tpu.core_type = #tpu.core_type<tc>, window_params = [{transform_indices = @transform_0, window_bounds = array<i64: 16, 32>}, {pipeline_mode = #tpu.pipeline_mode<synchronous>, transform_indices = @transform_1, window_bounds = array<i64: 1, 32>}, {pipeline_mode = #tpu.pipeline_mode<synchronous>, transform_indices = @transform_2, window_bounds = array<i64: 1, 32>}, {transform_indices = @transform_3, window_bounds = array<i64: 16, 32>}]} {
    %c0 = arith.constant 0 : index
    %c0_0 = arith.constant 0 : index
    %0 = vector.load %arg1[%c0, %c0_0] : memref<16x32xf32, #tpu.memory_space<vmem>>, vector<16x32xf32>
    %cst = arith.constant dense<0.000000e+00> : vector<16xf32>
    %1 = vector.multi_reduction <add>, %0, %cst [1] : vector<16x32xf32> to vector<16xf32>
    %2 = vector.shape_cast %1 : vector<16xf32> to vector<16x1xf32>
    %cst_1 = arith.constant 3.200000e+01 : f32
    %3 = vector.broadcast %cst_1 : f32 to vector<16x1xf32>
    %4 = arith.divf %2, %3 : vector<16x1xf32>
    %5 = vector.broadcast %4 : vector<16x1xf32> to vector<16x32xf32>
    %6 = arith.subf %0, %5 : vector<16x32xf32>
    %7 = arith.mulf %6, %6 : vector<16x32xf32>
    %cst_2 = arith.constant dense<0.000000e+00> : vector<16xf32>
    %8 = vector.multi_reduction <add>, %7, %cst_2 [1] : vector<16x32xf32> to vector<16xf32>
    %9 = vector.shape_cast %8 : vector<16xf32> to vector<16x1xf32>
    %cst_3 = arith.constant 3.200000e+01 : f32
    %10 = vector.broadcast %cst_3 : f32 to vector<16x1xf32>
    %11 = arith.divf %9, %10 : vector<16x1xf32>
    %cst_4 = arith.constant 9.99999996E-13 : f32
    %12 = vector.broadcast %cst_4 : f32 to vector<16x1xf32>
    %13 = arith.addf %11, %12 : vector<16x1xf32>
    %14 = math.rsqrt %13 : vector<16x1xf32>
    %15 = vector.broadcast %4 : vector<16x1xf32> to vector<16x32xf32>
    %16 = arith.subf %0, %15 : vector<16x32xf32>
    %17 = vector.broadcast %14 : vector<16x1xf32> to vector<16x32xf32>
    %18 = arith.mulf %16, %17 : vector<16x32xf32>
    %c0_5 = arith.constant 0 : index
    %c0_6 = arith.constant 0 : index
    %19 = vector.load %arg2[%c0_5, %c0_6] : memref<1x32xf32, #tpu.memory_space<vmem>>, vector<1x32xf32>
    %20 = vector.broadcast %19 : vector<1x32xf32> to vector<16x32xf32>
    %21 = arith.mulf %18, %20 : vector<16x32xf32>
    %c0_7 = arith.constant 0 : index
    %c0_8 = arith.constant 0 : index
    %22 = vector.load %arg3[%c0_7, %c0_8] : memref<1x32xf32, #tpu.memory_space<vmem>>, vector<1x32xf32>
    %23 = vector.broadcast %22 : vector<1x32xf32> to vector<16x32xf32>
    %24 = arith.addf %21, %23 : vector<16x32xf32>
    %25 = arith.truncf %24 : vector<16x32xf32> to vector<16x32xbf16>
    %c0_9 = arith.constant 0 : index
    %c0_10 = arith.constant 0 : index
    %26 = vector.load %arg4[%c0_9, %c0_10] : memref<16x32xbf16, #tpu.memory_space<vmem>>, vector<16x32xbf16>
    tpu.vector_store %arg4[%c0_9, %c0_10], %25 {strides = array<i32>} : memref<16x32xbf16, #tpu.memory_space<vmem>>, vector<16x32xbf16>,
    return
  }
  func.func @transform_0(%arg0: i32) -> (i32, i32) {
    %c0_i32 = arith.constant 0 : i32
    %c0_i32_0 = arith.constant 0 : i32
    return %arg0, %c0_i32 : i32, i32
  }
  func.func @transform_1(%arg0: i32) -> (i32, i32) {
    %c0_i32 = arith.constant 0 : i32
    %c0_i32_0 = arith.constant 0 : i32
    %c0_i32_1 = arith.constant 0 : i32
    return %c0_i32, %c0_i32_0 : i32, i32
  }
  func.func @transform_2(%arg0: i32) -> (i32, i32) {
    %c0_i32 = arith.constant 0 : i32
    %c0_i32_0 = arith.constant 0 : i32
    %c0_i32_1 = arith.constant 0 : i32
    return %c0_i32, %c0_i32_0 : i32, i32
  }
  func.func @transform_3(%arg0: i32) -> (i32, i32) {
    %c0_i32 = arith.constant 0 : i32
    %c0_i32_0 = arith.constant 0 : i32
    return %arg0, %c0_i32 : i32, i32
  }
}

</mosaic_0001>

<llo_original>
// kernel: tpu_custom_call.1
$region0: #{tpu_custom_call.1}
  #allocation0 [shape = 'u32[]', space=smem, size = 0x4, offset = 0x4, fixed_abs, tag = 'smem constant byte address 0x4 - core index']
  #allocation1 [shape = 'u32[144,128]{1,0:T(1,128)}', space=vmem, size = 0x12000, scoped, tag = 'internal scratch']
  %s0 = inlined_call_operand.hbm [shape: f32[16,32], index: 0, kind: input, shape index: {}]
  %s1 = inlined_call_operand.vmem [shape: f32[1,32], index: 1, kind: input, shape index: {}]
  %s2 = inlined_call_operand.vmem [shape: f32[1,32], index: 2, kind: input, shape index: {}]
  %s3 = inlined_call_operand.hbm [shape: bf16[16,32], index: 3, kind: output, shape index: {}]
  %s4 = sld [smem:[#allocation0]]
  $region26: #{tpu_custom_call.1} parent=0
    _
  %s6 = ssub.s32 1, %s4
  %s7 = scalar_select 0, %s6, %s4
  $region1: #{tpu_custom_call.1} parent=0
    #allocation2 [shape = 'u8[8192]{0}', space=vmem, size = 0x2000, scoped, tag = 'input window, operand 0, single buffered']
    #allocation3 [shape = 's32[1]{0}', space=sflag, size = 0x4, scoped, tag = 'scoped memory for tpu_custom_call.1']
    #allocation4 [shape = 's32[1]{0}', space=sflag, size = 0x4, scoped, tag = 'scoped memory for tpu_custom_call.1']
    #allocation5 [shape = 'u8[4096]{0}', space=vmem, size = 0x1000, scoped, tag = 'output window, operand 0, single buffered']
    %8 = vsyncpa [#allocation3], 0
    %9 = vsyncpa [#allocation4], 0
    // Predicated region
    $region2: #{tpu_custom_call.1} parent=1 // pred_check
      _
    $region3: #{tpu_custom_call.1} parent=1 // pred_check_branch
      %11 = sbr.rel (0) target = $region5
    $region4: #{tpu_custom_call.1} parent=1 // pred_region
      %s13 = ssub.s32 256, 256
      %14 = vsyncadd [#allocation3], %s13
      %s15 = sshll.u32 [#allocation2], 4
      %s16 = int_to_ptr.vmem [resolvable:$true] %s15
      %21 = dma.hbm_to_vmem [thread:$0]  %s0, 256, %s16, [#allocation3], 128, 128, 8
    $region5: #{tpu_custom_call.1} parent=1 // pred_fallthru
      _
    // Predicated region
    $region6: #{tpu_custom_call.1} parent=1 // pred_check
      _
    $region7: #{tpu_custom_call.1} parent=1 // pred_check_branch
      %23 = sbr.rel (0) target = $region9
    $region8: #{tpu_custom_call.1} parent=1 // pred_region
      _
    $region9: #{tpu_custom_call.1} parent=1 // pred_fallthru
      _
    // Predicated region
    $region10: #{tpu_custom_call.1} parent=1 // pred_check
      _
    $region11: #{tpu_custom_call.1} parent=1 // pred_check_branch
      %25 = sbr.rel (0) target = $region13
    $region12: #{tpu_custom_call.1} parent=1 // pred_region
      _
    $region13: #{tpu_custom_call.1} parent=1 // pred_fallthru
      _
    // Predicated region
    $region14: #{tpu_custom_call.1} parent=1 // pred_check
      _
    $region15: #{tpu_custom_call.1} parent=1 // pred_check_branch
      %27 = sbr.rel (0) target = $region17
    $region16: #{tpu_custom_call.1} parent=1 // pred_region
      %28 = dma.done [#allocation3], 256
    $region17: #{tpu_custom_call.1} parent=1 // pred_fallthru
      _
    %v29 = vld [vmem:[#allocation2] sm:$0xff]
    %v30 = vld [vmem:[#allocation2 + $0x8] sm:$0xff]
    %vm31 = vcmask 261120
    %v32 = vsel %vm31, %v29, 0.0
    %33 = vadd.xlane.f32.xlu0 %v32
    %v34 = vpop.xlane.xlu0 %33
    %v35 = vsel %vm31, %v30, 0.0
    %36 = vadd.xlane.f32.xlu0 %v35
    %v37 = vpop.xlane.xlu0 %36
    %v38 = vrcp.pop 32.0
    %v39 = vmul.f32 %v34, %v38
    %v40 = vmul.f32 %v37, %v38
    %v41 = vsub.f32 %v29, %v39
    %v42 = vsub.f32 %v30, %v40
    %v43 = vmul.f32 %v41, %v41
    %v44 = vmul.f32 %v42, %v42
    %v45 = vsel %vm31, %v43, 0.0
    %46 = vadd.xlane.f32.xlu0 %v45
    %v47 = vpop.xlane.xlu0 %46
    %v48 = vsel %vm31, %v44, 0.0
    %49 = vadd.xlane.f32.xlu0 %v48
    %v50 = vpop.xlane.xlu0 %49
    %v51 = vmul.f32 %v47, %v38
    %v52 = vmul.f32 %v50, %v38
    %v53 = vadd.f32 %v51, 1e-12
    %v54 = vadd.f32 %v52, 1e-12
    %v55 = vrsqrt.pop %v53
    %v56 = vrsqrt.pop %v54
    %v57 = vmul.f32 %v41, %v55
    %v58 = vmul.f32 %v42, %v56
    %v59 = vld [vmem:[%s1] sm:$0x1]
    %v61 = vlaneseq
    %v62 = vshrl.u32 %v61, 7
    %v63 = vsub.s32 0, %v62
    %v64 = vrot.slane %v59, %v63
    %v66 = vmul.f32 %v57, %v64
    %v67 = vmul.f32 %v58, %v64
    %v68 = vld [vmem:[%s2] sm:$0x1]
    %v70 = vlaneseq
    %v71 = vshrl.u32 %v70, 7
    %v72 = vsub.s32 0, %v71
    %v73 = vrot.slane %v68, %v72
    %v75 = vadd.f32 %v66, %v73
    %v76 = vadd.f32 %v67, %v73
    %v77 = vpack.c.bf16 %v76, %v75
    %v79 = vunpack.c.l.b16 %v77
    %v80 = vunpack.c.h.b16 %v77
    %v81 = vpack.c.b16 %v79, %v79
    %v82 = vpack.c.b16 %v80, %v80
    %vm85 = vcmask 257024
    %86 = vst.msk [vmem:[#allocation5] sm:$0xf] %vm85, %v81
    %87 = vst.msk [vmem:[#allocation5 + $0x4] sm:$0xf] %vm85, %v82
    // Predicated region
    $region18: #{tpu_custom_call.1} parent=1 // pred_check
      _
    $region19: #{tpu_custom_call.1} parent=1 // pred_check_branch
      %89 = sbr.rel (0) target = $region21
    $region20: #{tpu_custom_call.1} parent=1 // pred_region
      %s91 = ssub.s32 128, 128
      %92 = vsyncadd [#allocation4], %s91
      %s93 = sshll.u32 [#allocation5], 4
      %s94 = int_to_ptr.vmem [resolvable:$true] %s93
      %99 = dma.vmem_to_hbm [thread:$0]  %s94, 128, %s3, [#allocation4], 64, 64, 4
    $region21: #{tpu_custom_call.1} parent=1 // pred_fallthru
      _
    // Predicated region
    $region22: #{tpu_custom_call.1} parent=1 // pred_check
      _
    $region23: #{tpu_custom_call.1} parent=1 // pred_check_branch
      %101 = sbr.rel (0) target = $region25
    $region24: #{tpu_custom_call.1} parent=1 // pred_region
      %102 = dma.done [#allocation4], 128
    $region25: #{tpu_custom_call.1} parent=1 // pred_fallthru
      _
    %103 = vsyncpa [#allocation3], 1
    %104 = vsyncpa [#allocation4], 1

</llo_original>
